<compile_context>
chip_gen: v6e
topology: v6e:2x2x1
jax: 0.10.0
libtpu: 0.0.40
codegen_flags: <defaults>
</compile_context>

<pallas_src>
import functools

import jax
import jax.numpy as jnp
from jax.experimental import pallas as pl
from jax.experimental.pallas import tpu as pltpu

_LANE = 128  # lane width: output dims of each layer padded to this


def _round_up(n: int, m: int) -> int:
    return ((n + m - 1) // m) * m


def _nbytes(a) -> int:
    return int(a.size) * jnp.dtype(a.dtype).itemsize


def _mlp_kernel(x_ref, w1_ref, b1_ref, w2_ref, b2_ref, o_ref, *, matmul_dtype):
    # Layer 1: x @ W1 + b1, ReLU.  MXU matmul with f32 accumulation.
    x = x_ref[...].astype(matmul_dtype)
    h = jnp.dot(x, w1_ref[...], preferred_element_type=jnp.float32)
    # Bias add + ReLU in f32 on the VPU (free slack next to the MXU).
    h = jnp.maximum(h + b1_ref[...], 0.0)
    # Layer 2: h @ W2 + b2.
    # NOTE: with matmul_dtype=bfloat16 the f32 post-ReLU hidden is rounded to
    # bf16 before the second matmul (one extra rounding step vs. torch f32).
    out = jnp.dot(h.astype(matmul_dtype), w2_ref[...],
                  preferred_element_type=jnp.float32)
    o_ref[...] = (out + b2_ref[...]).astype(o_ref.dtype)


def prepare_params(w1, b1, w2, b2, *, matmul_dtype=jnp.float32):
    """Pad (and optionally pre-cast) the MLP parameters ONCE at init.

    Hoisted out of the per-call forward: RL loops call forward thousands of
    times and re-padding weights every call re-reads the full weights in HBM.
    Only the *output* (lane) dims of each layer are padded to a multiple of
    128; the contraction dims keep their real extents.

    w1: (obs_dim, hidden)  b1: (hidden,)  w2: (hidden, act_dim)  b2: (act_dim,)
    """
    obs_dim, hidden = w1.shape
    act_dim = w2.shape[1]
    hid_p = _round_up(hidden, _LANE)
    act_p = _round_up(act_dim, _LANE)

    # Weights in matmul_dtype (bf16 halves weight HBM traffic on v6e/v7x);
    # biases stay f32 (the bias add / ReLU path is f32).
    w1p = jnp.pad(w1, ((0, 0), (0, hid_p - hidden))).astype(matmul_dtype)
    b1p = jnp.pad(b1.reshape(1, -1),
                  ((0, 0), (0, hid_p - hidden))).astype(jnp.float32)
    w2p = jnp.pad(w2, ((0, hid_p - hidden),
                       (0, act_p - act_dim))).astype(matmul_dtype)
    b2p = jnp.pad(b2.reshape(1, -1),
                  ((0, 0), (0, act_p - act_dim))).astype(jnp.float32)

    dims = dict(obs_dim=obs_dim, hidden=hidden, act_dim=act_dim,
                hid_p=hid_p, act_p=act_p)
    return (w1p, b1p, w2p, b2p), dims, jnp.dtype(matmul_dtype)


def base_network_forward(x, prepared, *, num_batch_blocks=1, unpad_output=True):
    """Fused MLP forward.

    x: (B, obs_dim) f32; `prepared` comes from prepare_params().
    num_batch_blocks: 1 for v5e/v6e (single TC); 2 on v7x so the "parallel"
    batch axis puts one block on each TensorCore.
    """
    (w1p, b1p, w2p, b2p), dims, matmul_dtype = prepared
    B, obs_dim = x.shape
    if obs_dim != dims["obs_dim"]:
        raise ValueError("observation width mismatch")
    hidden, act_dim = dims["hidden"], dims["act_dim"]
    hid_p, act_p = dims["hid_p"], dims["act_p"]

    # bf16 tiles pack 16 rows per vreg sublane group; f32 packs 8.
    sublane = 16 if matmul_dtype == jnp.dtype(jnp.bfloat16) else 8

    n_blocks = max(1, int(num_batch_blocks))
    tb = _round_up(-(-max(B, sublane) // n_blocks), sublane)
    b_p = tb * n_blocks

    # Only batch rows of x get padded (layout plumbing, zero-filled).
    xp = x if b_p == B else jnp.pad(x, ((0, b_p - B), (0, 0)))

    # Cost estimate from real / post-optimization sizes (not padded FLOPs).
    flops = 2 * B * (obs_dim * hidden + hidden * act_dim)
    bytes_accessed = (B * obs_dim * 4 + B * act_dim * 4
                      + _nbytes(w1p) + _nbytes(b1p)
                      + _nbytes(w2p) + _nbytes(b2p))

    # Raise the scoped-VMEM limit only when the resident params need it
    # (v5e default scoped VMEM is 16 MiB; v7x physical VMEM is 64 MiB).
    vmem_needed = (
        2 * (tb * obs_dim + tb * act_p) * 4                      # streamed x/out tiles
        + 2 * (_nbytes(w1p) + _nbytes(b1p) + _nbytes(w2p) + _nbytes(b2p))
        + tb * hid_p * 4)                                        # hidden intermediate
    vmem_limit = None
    if vmem_needed > 16 * 1024 * 1024:
        vmem_limit = min(64 * 1024 * 1024, int(vmem_needed * 1.25) + (1 << 20))

    kernel = functools.partial(_mlp_kernel, matmul_dtype=matmul_dtype)

    out_padded = pl.pallas_call(
        kernel,
        out_shape=jax.ShapeDtypeStruct((b_p, act_p), jnp.float32),
        grid_spec=pltpu.PrefetchScalarGridSpec(
            num_scalar_prefetch=0,
            grid=(n_blocks,),
            in_specs=[
                # Activations: one batch tile per grid step; K (obs) dim kept
                # at its real, full extent (legal: equals the array dim).
                pl.BlockSpec((tb, obs_dim), lambda i: (i, 0)),
                # Params: constant index_map -> fetched once, VMEM-resident.
                pl.BlockSpec((obs_dim, hid_p), lambda i: (0, 0)),
                pl.BlockSpec((1, hid_p), lambda i: (0, 0)),
                pl.BlockSpec((hid_p, act_p), lambda i: (0, 0)),
                pl.BlockSpec((1, act_p), lambda i: (0, 0)),
            ],
            out_specs=pl.BlockSpec((tb, act_p), lambda i: (i, 0)),
        ),
        compiler_params=pltpu.CompilerParams(
            dimension_semantics=("parallel",),   # 2 TCs on v7x; neutral v5e/v6e
            vmem_limit_bytes=vmem_limit),
        cost_estimate=pl.CostEstimate(
            flops=flops, transcendentals=0, bytes_accessed=bytes_accessed),
    )(xp, w1p, b1p, w2p, b2p)

    if unpad_output:
        # Consumers that accept the lane-dense padded slab can pass
        # unpad_output=False and skip this extra HBM pass.
        return out_padded[:B, :act_dim]
    return out_padded


def _reference_forward(x, w1, b1, w2, b2):
    h = jnp.maximum(x @ w1 + b1, 0.0)
    return h @ w2 + b2


if __name__ == "__main__":
    # Small shapes implied by the module: observation dim 16, action dim 4,
    # hidden width 32, batch 64.
    batch, obs_dim, hidden, act_dim = 64, 16, 32, 4

    key = jax.random.PRNGKey(0)
    kx, kw1, kb1, kw2, kb2 = jax.random.split(key, 5)

    x = jax.random.normal(kx, (batch, obs_dim), dtype=jnp.float32)
    # Deterministic torch.nn.Linear-style init (uniform +- 1/sqrt(fan_in)).
    lim1 = 1.0 / jnp.sqrt(jnp.float32(obs_dim))
    lim2 = 1.0 / jnp.sqrt(jnp.float32(hidden))
    w1 = jax.random.uniform(kw1, (obs_dim, hidden), jnp.float32, -lim1, lim1)
    b1 = jax.random.uniform(kb1, (hidden,), jnp.float32, -lim1, lim1)
    w2 = jax.random.uniform(kw2, (hidden, act_dim), jnp.float32, -lim2, lim2)
    b2 = jax.random.uniform(kb2, (act_dim,), jnp.float32, -lim2, lim2)

    # Pad / lay out parameters once (f32 by default = exact torch semantics;
    # pass matmul_dtype=jnp.bfloat16 on v6e/v7x for full MXU throughput and
    # halved weight DMA).
    prepared = prepare_params(w1, b1, w2, b2)

    ref = _reference_forward(x, w1, b1, w2, b2)

    # Default path: single grid step (minimal pipeline overhead on v5e/v6e).
    out = base_network_forward(x, prepared)
    out = jax.block_until_ready(out)
    assert out.shape == (batch, act_dim)
    assert jnp.allclose(out, ref, atol=1e-5, rtol=1e-5)

    # v7x-style path: 2 batch blocks, one per TensorCore (correctness check).
    out2 = base_network_forward(x, prepared, num_batch_blocks=2)
    out2 = jax.block_until_ready(out2)
    assert jnp.allclose(out2, ref, atol=1e-5, rtol=1e-5)

    print("KERNEL_OK")
</pallas_src>

<mosaic_0001>
module attributes {stable_mosaic.version = 11 : i64} {
  func.func @_mlp_kernel(%arg0: i32, %arg1: memref<64x16xf32, #tpu.memory_space<vmem>>, %arg2: memref<16x128xf32, #tpu.memory_space<vmem>>, %arg3: memref<1x128xf32, #tpu.memory_space<vmem>>, %arg4: memref<128x128xf32, #tpu.memory_space<vmem>>, %arg5: memref<1x128xf32, #tpu.memory_space<vmem>>, %arg6: memref<64x128xf32, #tpu.memory_space<vmem>>) attributes {dimension_semantics = [#tpu.dimension_semantics<parallel>], iteration_bounds = array<i64: 1>, scalar_prefetch = 0 : i64, scratch_operands = 0 : i64, tpu.core_type = #tpu.core_type<tc>, window_params = [{transform_indices = @transform_0, window_bounds = array<i64: 64, 16>}, {pipeline_mode = #tpu.pipeline_mode<synchronous>, transform_indices = @transform_1, window_bounds = array<i64: 16, 128>}, {pipeline_mode = #tpu.pipeline_mode<synchronous>, transform_indices = @transform_2, window_bounds = array<i64: 1, 128>}, {pipeline_mode = #tpu.pipeline_mode<synchronous>, transform_indices = @transform_3, window_bounds = array<i64: 128, 128>}, {pipeline_mode = #tpu.pipeline_mode<synchronous>, transform_indices = @transform_4, window_bounds = array<i64: 1, 128>}, {transform_indices = @transform_5, window_bounds = array<i64: 64, 128>}]} {
    %c0 = arith.constant 0 : index
    %c0_0 = arith.constant 0 : index
    %0 = vector.load %arg1[%c0, %c0_0] : memref<64x16xf32, #tpu.memory_space<vmem>>, vector<64x16xf32>
    %c0_1 = arith.constant 0 : index
    %c0_2 = arith.constant 0 : index
    %1 = vector.load %arg2[%c0_1, %c0_2] : memref<16x128xf32, #tpu.memory_space<vmem>>, vector<16x128xf32>
    %cst = arith.constant dense<0.000000e+00> : vector<64x128xf32>
    %2 = tpu.matmul %0, %1, %cst {dimension_numbers = #tpu.dot_dimension_numbers<[1], [0], [0], [1], [0, 0, 1, 1], [], []>} : vector<64x16xf32>, vector<16x128xf32>, vector<64x128xf32> -> vector<64x128xf32>
    %c0_3 = arith.constant 0 : index
    %c0_4 = arith.constant 0 : index
    %3 = vector.load %arg3[%c0_3, %c0_4] : memref<1x128xf32, #tpu.memory_space<vmem>>, vector<1x128xf32>
    %4 = vector.broadcast %3 : vector<1x128xf32> to vector<64x128xf32>
    %5 = arith.addf %2, %4 : vector<64x128xf32>
    %cst_5 = arith.constant 0.000000e+00 : f32
    %6 = vector.broadcast %cst_5 : f32 to vector<64x128xf32>
    %7 = arith.maximumf %5, %6 : vector<64x128xf32>
    %c0_6 = arith.constant 0 : index
    %c0_7 = arith.constant 0 : index
    %8 = vector.load %arg4[%c0_6, %c0_7] : memref<128x128xf32, #tpu.memory_space<vmem>>, vector<128x128xf32>
    %cst_8 = arith.constant dense<0.000000e+00> : vector<64x128xf32>
    %9 = tpu.matmul %7, %8, %cst_8 {dimension_numbers = #tpu.dot_dimension_numbers<[1], [0], [0], [1], [0, 0, 1, 1], [], []>} : vector<64x128xf32>, vector<128x128xf32>, vector<64x128xf32> -> vector<64x128xf32>
    %c0_9 = arith.constant 0 : index
    %c0_10 = arith.constant 0 : index
    %10 = vector.load %arg5[%c0_9, %c0_10] : memref<1x128xf32, #tpu.memory_space<vmem>>, vector<1x128xf32>
    %11 = vector.broadcast %10 : vector<1x128xf32> to vector<64x128xf32>
    %12 = arith.addf %9, %11 : vector<64x128xf32>
    %c0_11 = arith.constant 0 : index
    %c0_12 = arith.constant 0 : index
    %13 = vector.load %arg6[%c0_11, %c0_12] : memref<64x128xf32, #tpu.memory_space<vmem>>, vector<64x128xf32>
    tpu.vector_store %arg6[%c0_11, %c0_12], %12 {strides = array<i32>} : memref<64x128xf32, #tpu.memory_space<vmem>>, vector<64x128xf32>,
    return
  }
  func.func @transform_0(%arg0: i32) -> (i32, i32) {
    %c0_i32 = arith.constant 0 : i32
    %c0_i32_0 = arith.constant 0 : i32
    return %arg0, %c0_i32 : i32, i32
  }
  func.func @transform_1(%arg0: i32) -> (i32, i32) {
    %c0_i32 = arith.constant 0 : i32
    %c0_i32_0 = arith.constant 0 : i32
    %c0_i32_1 = arith.constant 0 : i32
    return %c0_i32, %c0_i32_0 : i32, i32
  }
  func.func @transform_2(%arg0: i32) -> (i32, i32) {
    %c0_i32 = arith.constant 0 : i32
    %c0_i32_0 = arith.constant 0 : i32
    %c0_i32_1 = arith.constant 0 : i32
    return %c0_i32, %c0_i32_0 : i32, i32
  }
  func.func @transform_3(%arg0: i32) -> (i32, i32) {
    %c0_i32 = arith.constant 0 : i32
    %c0_i32_0 = arith.constant 0 : i32
    %c0_i32_1 = arith.constant 0 : i32
    return %c0_i32, %c0_i32_0 : i32, i32
  }
  func.func @transform_4(%arg0: i32) -> (i32, i32) {
    %c0_i32 = arith.constant 0 : i32
    %c0_i32_0 = arith.constant 0 : i32
    %c0_i32_1 = arith.constant 0 : i32
    return %c0_i32, %c0_i32_0 : i32, i32
  }
  func.func @transform_5(%arg0: i32) -> (i32, i32) {
    %c0_i32 = arith.constant 0 : i32
    %c0_i32_0 = arith.constant 0 : i32
    return %arg0, %c0_i32 : i32, i32
  }
}

</mosaic_0001>

<llo_original>
// kernel: tpu_custom_call.1
$region0: #{tpu_custom_call.1}
  #allocation0 [shape = 'u32[]', space=smem, size = 0x4, offset = 0x4, fixed_abs, tag = 'smem constant byte address 0x4 - core index']
  #allocation1 [shape = 'u32[144,128]{1,0:T(1,128)}', space=vmem, size = 0x12000, scoped, tag = 'internal scratch']
  %s0 = inlined_call_operand.vmem [shape: f32[64,16], index: 0, kind: input, shape index: {}]
  %s1 = inlined_call_operand.vmem [shape: f32[16,128], index: 1, kind: input, shape index: {}]
  %s2 = inlined_call_operand.vmem [shape: f32[1,128], index: 2, kind: input, shape index: {}]
  %s3 = inlined_call_operand.hbm [shape: f32[128,128], index: 3, kind: input, shape index: {}]
  %s4 = inlined_call_operand.vmem [shape: f32[1,128], index: 4, kind: input, shape index: {}]
  %s5 = inlined_call_operand.hbm [shape: f32[64,128], index: 5, kind: output, shape index: {}]
  %s6 = sld [smem:[#allocation0]]
  $region34: #{tpu_custom_call.1} parent=0
    _
  %s8 = ssub.s32 1, %s6
  %s9 = scalar_select 0, %s8, %s6
  $region1: #{tpu_custom_call.1} parent=0
    #allocation2 [shape = 'u8[65536]{0}', space=vmem, size = 0x10000, scoped, tag = 'input window, operand 3, single buffered']
    #allocation3 [shape = 's32[1]{0}', space=sflag, size = 0x4, scoped, tag = 'scoped memory for tpu_custom_call.1']
    #allocation4 [shape = 's32[1]{0}', space=sflag, size = 0x4, scoped, tag = 'scoped memory for tpu_custom_call.1']
    #allocation5 [shape = 'u8[32768]{0}', space=vmem, size = 0x8000, scoped, tag = 'output window, operand 0, single buffered']
    %10 = vsyncpa [#allocation3], 0
    %11 = vsyncpa [#allocation4], 0
    // Predicated region
    $region2: #{tpu_custom_call.1} parent=1 // pred_check
      _
    $region3: #{tpu_custom_call.1} parent=1 // pred_check_branch
      %13 = sbr.rel (0) target = $region5
    $region4: #{tpu_custom_call.1} parent=1 // pred_region
      _
    $region5: #{tpu_custom_call.1} parent=1 // pred_fallthru
      _
    // Predicated region
    $region6: #{tpu_custom_call.1} parent=1 // pred_check
      _
    $region7: #{tpu_custom_call.1} parent=1 // pred_check_branch
      %15 = sbr.rel (0) target = $region9
    $region8: #{tpu_custom_call.1} parent=1 // pred_region
      _
    $region9: #{tpu_custom_call.1} parent=1 // pred_fallthru
      _
    // Predicated region
    $region10: #{tpu_custom_call.1} parent=1 // pred_check
      _
    $region11: #{tpu_custom_call.1} parent=1 // pred_check_branch
      %17 = sbr.rel (0) target = $region13
    $region12: #{tpu_custom_call.1} parent=1 // pred_region
      _
    $region13: #{tpu_custom_call.1} parent=1 // pred_fallthru
      _
    // Predicated region
    $region14: #{tpu_custom_call.1} parent=1 // pred_check
      _
    $region15: #{tpu_custom_call.1} parent=1 // pred_check_branch
      %19 = sbr.rel (0) target = $region17
    $region16: #{tpu_custom_call.1} parent=1 // pred_region
      %s21 = ssub.s32 2048, 2048
      %22 = vsyncadd [#allocation3], %s21
      %s23 = sshll.u32 [#allocation2], 4
      %s24 = int_to_ptr.vmem [resolvable:$true] %s23
      %29 = dma.hbm_to_vmem [thread:$0]  %s3, 2048, %s24, [#allocation3], 128, 128, 8
    $region17: #{tpu_custom_call.1} parent=1 // pred_fallthru
      _
    // Predicated region
    $region18: #{tpu_custom_call.1} parent=1 // pred_check
      _
    $region19: #{tpu_custom_call.1} parent=1 // pred_check_branch
      %31 = sbr.rel (0) target = $region21
    $region20: #{tpu_custom_call.1} parent=1 // pred_region
      _
    $region21: #{tpu_custom_call.1} parent=1 // pred_fallthru
      _
    // Predicated region
    $region22: #{tpu_custom_call.1} parent=1 // pred_check
      _
    $region23: #{tpu_custom_call.1} parent=1 // pred_check_branch
      %33 = sbr.rel (0) target = $region25
    $region24: #{tpu_custom_call.1} parent=1 // pred_region
      %34 = dma.done [#allocation3], 2048
    $region25: #{tpu_custom_call.1} parent=1 // pred_fallthru
      _
    %v35 = vld [vmem:[%s0] sm:$0xff]
    %v36 = vld [vmem:[%s0 + $0x8] sm:$0xff]
    %v37 = vld [vmem:[%s0 + $0x10] sm:$0xff]
    %v38 = vld [vmem:[%s0 + $0x18] sm:$0xff]
    %v39 = vld [vmem:[%s0 + $0x20] sm:$0xff]
    %v40 = vld [vmem:[%s0 + $0x28] sm:$0xff]
    %v41 = vld [vmem:[%s0 + $0x30] sm:$0xff]
    %v42 = vld [vmem:[%s0 + $0x38] sm:$0xff]
    %v43 = vld [vmem:[%s1] sm:$0xff]
    %v44 = vld [vmem:[%s1 + $0x8] sm:$0xff]
    %v45 = vld [vmem:[%s2] sm:$0x1]
    %v47 = vlaneseq
    %v48 = vshrl.u32 %v47, 7
    %v49 = vsub.s32 0, %v48
    %v50 = vrot.slane %v45, %v49
    %vm52 = vcmask 130048
    %v54 = vsel %vm52, %v35, 0
    %v57 = vsel %vm52, %v36, 0
    %v60 = vsel %vm52, %v37, 0
    %v63 = vsel %vm52, %v38, 0
    %v66 = vsel %vm52, %v39, 0
    %v69 = vsel %vm52, %v40, 0
    %v72 = vsel %vm52, %v41, 0
    %v75 = vsel %vm52, %v42, 0
    %77 = vmatprep.subr.mxu0 0.0
    %78 = vmatpush1.msra.mxu0 0.0
    %79 = vmatprep.subr.mxu0 0.0
    %80 = vmatpush1.msra.mxu0 0.0
    %81 = vmatprep.subr.mxu0 0.0
    %82 = vmatpush1.msra.mxu0 0.0
    %83 = vmatprep.subr.mxu0 0.0
    %84 = vmatpush1.msra.mxu0 0.0
    %85 = vmatprep.subr.mxu0 0.0
    %86 = vmatpush1.msra.mxu0 0.0
    %87 = vmatprep.subr.mxu0 0.0
    %88 = vmatpush1.msra.mxu0 0.0
    %89 = vmatprep.subr.mxu0 0.0
    %90 = vmatpush1.msra.mxu0 0.0
    %91 = vmatprep.subr.mxu0 0.0
    %92 = vmatpush1.msra.mxu0 0.0
    %93 = vmatprep.subr.mxu0 0.0
    %94 = vmatpush1.msra.mxu0 0.0
    %95 = vmatprep.subr.mxu0 0.0
    %96 = vmatpush1.msra.mxu0 0.0
    %97 = vmatprep.subr.mxu0 0.0
    %98 = vmatpush1.msra.mxu0 0.0
    %99 = vmatprep.subr.mxu0 0.0
    %100 = vmatpush1.msra.mxu0 0.0
    %101 = vmatprep.subr.mxu0 0.0
    %102 = vmatpush1.msra.mxu0 0.0
    %103 = vmatprep.subr.mxu0 0.0
    %104 = vmatpush1.msra.mxu0 0.0
    %105 = vmatprep.subr.mxu0 0.0
    %106 = vmatpush1.msra.mxu0 %v44
    %107 = vmatprep.subr.mxu0 0.0
    %108 = vmatpush1.msra.mxu0 %v43
    %109 = vmatprep.subr.mxu0 0.0
    %110 = vmatpush2.msra.mxu0 0.0
    %111 = vmatprep.subr.mxu0 0.0
    %112 = vmatpush2.msra.mxu0 0.0
    %113 = vmatprep.subr.mxu0 0.0
    %114 = vmatpush2.msra.mxu0 0.0
    %115 = vmatprep.subr.mxu0 0.0
    %116 = vmatpush2.msra.mxu0 0.0
    %117 = vmatprep.subr.mxu0 0.0
    %118 = vmatpush2.msra.mxu0 0.0
    %119 = vmatprep.subr.mxu0 0.0
    %120 = vmatpush2.msra.mxu0 0.0
    %121 = vmatprep.subr.mxu0 0.0
    %122 = vmatpush2.msra.mxu0 0.0
    %123 = vmatprep.subr.mxu0 0.0
    %124 = vmatpush2.msra.mxu0 0.0
    %125 = vmatprep.subr.mxu0 0.0
    %126 = vmatpush2.msra.mxu0 0.0
    %127 = vmatprep.subr.mxu0 0.0
    %128 = vmatpush2.msra.mxu0 0.0
    %129 = vmatprep.subr.mxu0 0.0
    %130 = vmatpush2.msra.mxu0 0.0
    %131 = vmatprep.subr.mxu0 0.0
    %132 = vmatpush2.msra.mxu0 0.0
    %133 = vmatprep.subr.mxu0 0.0
    %134 = vmatpush2.msra.mxu0 0.0
    %135 = vmatprep.subr.mxu0 0.0
    %136 = vmatpush2.msra.mxu0 0.0
    %137 = vmatprep.subr.mxu0 0.0
    %138 = vmatpush2.msra.mxu0 0.0
    %139 = vmatprep.subr.mxu0 0.0
    %140 = vmatpush2.msra.mxu0 0.0
    %141 = vmatprep.mubr.f32.mxu0 0.0
    %142 = vmatmul.mubr.f32.gmra.mxu0 %v54
    %v143 = vpop.f32.mrf.mxu0
    %v144 = vadd.f32 %v50, %v143
    %v145 = vpop.f32.mrf.mxu0
    %146 = vmatprep.mubr.f32.mxu0 0.0
    %147 = vmatmul.mubr.f32.gmra.mxu0 %v57
    %v148 = vpop.f32.mrf.mxu0
    %v149 = vadd.f32 %v50, %v148
    %v150 = vpop.f32.mrf.mxu0
    %151 = vmatprep.mubr.f32.mxu0 0.0
    %152 = vmatmul.mubr.f32.gmra.mxu0 %v60
    %v153 = vpop.f32.mrf.mxu0
    %v154 = vadd.f32 %v50, %v153
    %v155 = vpop.f32.mrf.mxu0
    %156 = vmatprep.mubr.f32.mxu0 0.0
    %157 = vmatmul.mubr.f32.gmra.mxu0 %v63
    %v158 = vpop.f32.mrf.mxu0
    %v159 = vadd.f32 %v50, %v158
    %v160 = vpop.f32.mrf.mxu0
    %161 = vmatprep.mubr.f32.mxu0 0.0
    %162 = vmatmul.mubr.f32.gmra.mxu0 %v66
    %v163 = vpop.f32.mrf.mxu0
    %v164 = vadd.f32 %v50, %v163
    %v165 = vpop.f32.mrf.mxu0
    %166 = vmatprep.mubr.f32.mxu0 0.0
    %167 = vmatmul.mubr.f32.gmra.mxu0 %v69
    %v168 = vpop.f32.mrf.mxu0
    %v169 = vadd.f32 %v50, %v168
    %v170 = vpop.f32.mrf.mxu0
    %171 = vmatprep.mubr.f32.mxu0 0.0
    %172 = vmatmul.mubr.f32.gmra.mxu0 %v72
    %v173 = vpop.f32.mrf.mxu0
    %v174 = vadd.f32 %v50, %v173
    %v175 = vpop.f32.mrf.mxu0
    %176 = vmatprep.mubr.f32.mxu0 0.0
    %177 = vmatmul.mubr.f32.gmra.mxu0 %v75
    %v178 = vpop.f32.mrf.mxu0
    %v179 = vadd.f32 %v50, %v178
    %v180 = vpop.f32.mrf.mxu0
    %181 = vdwg.mxu0
    %v182 = vmax.f32 %v144, 0.0
    %v183 = vmax.f32 %v149, 0.0
    %v184 = vmax.f32 %v154, 0.0
    %v185 = vmax.f32 %v159, 0.0
    %v186 = vmax.f32 %v164, 0.0
    %v187 = vmax.f32 %v169, 0.0
    %v188 = vmax.f32 %v174, 0.0
    %v189 = vmax.f32 %v179, 0.0
    %v190 = vld [vmem:[#allocation2] sm:$0xff]
    %v191 = vld [vmem:[#allocation2 + $0x8] sm:$0xff]
    %v192 = vld [vmem:[#allocation2 + $0x10] sm:$0xff]
    %v193 = vld [vmem:[#allocation2 + $0x18] sm:$0xff]
    %v194 = vld [vmem:[#allocation2 + $0x20] sm:$0xff]
    %v195 = vld [vmem:[#allocation2 + $0x28] sm:$0xff]
    %v196 = vld [vmem:[#allocation2 + $0x30] sm:$0xff]
    %v197 = vld [vmem:[#allocation2 + $0x38] sm:$0xff]
    %v198 = vld [vmem:[#allocation2 + $0x40] sm:$0xff]
    %v199 = vld [vmem:[#allocation2 + $0x48] sm:$0xff]
    %v200 = vld [vmem:[#allocation2 + $0x50] sm:$0xff]
    %v201 = vld [vmem:[#allocation2 + $0x58] sm:$0xff]
    %v202 = vld [vmem:[#allocation2 + $0x60] sm:$0xff]
    %v203 = vld [vmem:[#allocation2 + $0x68] sm:$0xff]
    %v204 = vld [vmem:[#allocation2 + $0x70] sm:$0xff]
    %v205 = vld [vmem:[#allocation2 + $0x78] sm:$0xff]
    %v206 = vld [vmem:[%s4] sm:$0x1]
    %v208 = vlaneseq
    %v209 = vshrl.u32 %v208, 7
    %v210 = vsub.s32 0, %v209
    %v211 = vrot.slane %v206, %v210
    %213 = vmatprep.subr.mxu0 0.0
    %214 = vmatpush1.msra.mxu0 %v205
    %215 = vmatprep.subr.mxu0 0.0
    %216 = vmatpush1.msra.mxu0 %v204
    %217 = vmatprep.subr.mxu0 0.0
    %218 = vmatpush1.msra.mxu0 %v203
    %219 = vmatprep.subr.mxu0 0.0
    %220 = vmatpush1.msra.mxu0 %v202
    %221 = vmatprep.subr.mxu0 0.0
    %222 = vmatpush1.msra.mxu0 %v201
    %223 = vmatprep.subr.mxu0 0.0
    %224 = vmatpush1.msra.mxu0 %v200
    %225 = vmatprep.subr.mxu0 0.0
    %226 = vmatpush1.msra.mxu0 %v199
    %227 = vmatprep.subr.mxu0 0.0
    %228 = vmatpush1.msra.mxu0 %v198
    %229 = vmatprep.subr.mxu0 0.0
    %230 = vmatpush1.msra.mxu0 %v197
    %231 = vmatprep.subr.mxu0 0.0
    %232 = vmatpush1.msra.mxu0 %v196
    %233 = vmatprep.subr.mxu0 0.0
    %234 = vmatpush1.msra.mxu0 %v195
    %235 = vmatprep.subr.mxu0 0.0
    %236 = vmatpush1.msra.mxu0 %v194
    %237 = vmatprep.subr.mxu0 0.0
    %238 = vmatpush1.msra.mxu0 %v193
    %239 = vmatprep.subr.mxu0 0.0
    %240 = vmatpush1.msra.mxu0 %v192
    %241 = vmatprep.subr.mxu0 0.0
    %242 = vmatpush1.msra.mxu0 %v191
    %243 = vmatprep.subr.mxu0 0.0
    %244 = vmatpush1.msra.mxu0 %v190
    %245 = vmatprep.subr.mxu0 0.0
    %246 = vmatpush2.msra.mxu0 0.0
    %247 = vmatprep.subr.mxu0 0.0
    %248 = vmatpush2.msra.mxu0 0.0
    %249 = vmatprep.subr.mxu0 0.0
    %250 = vmatpush2.msra.mxu0 0.0
    %251 = vmatprep.subr.mxu0 0.0
    %252 = vmatpush2.msra.mxu0 0.0
    %253 = vmatprep.subr.mxu0 0.0
    %254 = vmatpush2.msra.mxu0 0.0
    %255 = vmatprep.subr.mxu0 0.0
    %256 = vmatpush2.msra.mxu0 0.0
    %257 = vmatprep.subr.mxu0 0.0
    %258 = vmatpush2.msra.mxu0 0.0
    %259 = vmatprep.subr.mxu0 0.0
    %260 = vmatpush2.msra.mxu0 0.0
    %261 = vmatprep.subr.mxu0 0.0
    %262 = vmatpush2.msra.mxu0 0.0
    %263 = vmatprep.subr.mxu0 0.0
    %264 = vmatpush2.msra.mxu0 0.0
    %265 = vmatprep.subr.mxu0 0.0
    %266 = vmatpush2.msra.mxu0 0.0
    %267 = vmatprep.subr.mxu0 0.0
    %268 = vmatpush2.msra.mxu0 0.0
    %269 = vmatprep.subr.mxu0 0.0
    %270 = vmatpush2.msra.mxu0 0.0
    %271 = vmatprep.subr.mxu0 0.0
    %272 = vmatpush2.msra.mxu0 0.0
    %273 = vmatprep.subr.mxu0 0.0
    %274 = vmatpush2.msra.mxu0 0.0
    %275 = vmatprep.subr.mxu0 0.0
    %276 = vmatpush2.msra.mxu0 0.0
    %277 = vmatprep.mubr.f32.mxu0 0.0
    %278 = vmatmul.mubr.f32.gmra.mxu0 %v182
    %v279 = vpop.f32.mrf.mxu0
    %v280 = vadd.f32 %v211, %v279
    %v281 = vpop.f32.mrf.mxu0
    %282 = vmatprep.mubr.f32.mxu0 0.0
    %283 = vmatmul.mubr.f32.gmra.mxu0 %v183
    %v284 = vpop.f32.mrf.mxu0
    %v285 = vadd.f32 %v211, %v284
    %v286 = vpop.f32.mrf.mxu0
    %287 = vmatprep.mubr.f32.mxu0 0.0
    %288 = vmatmul.mubr.f32.gmra.mxu0 %v184
    %v289 = vpop.f32.mrf.mxu0
    %v290 = vadd.f32 %v211, %v289
    %v291 = vpop.f32.mrf.mxu0
    %292 = vmatprep.mubr.f32.mxu0 0.0
    %293 = vmatmul.mubr.f32.gmra.mxu0 %v185
    %v294 = vpop.f32.mrf.mxu0
    %v295 = vadd.f32 %v211, %v294
    %v296 = vpop.f32.mrf.mxu0
    %297 = vmatprep.mubr.f32.mxu0 0.0
    %298 = vmatmul.mubr.f32.gmra.mxu0 %v186
    %v299 = vpop.f32.mrf.mxu0
    %v300 = vadd.f32 %v211, %v299
    %v301 = vpop.f32.mrf.mxu0
    %302 = vmatprep.mubr.f32.mxu0 0.0
    %303 = vmatmul.mubr.f32.gmra.mxu0 %v187
    %v304 = vpop.f32.mrf.mxu0
    %v305 = vadd.f32 %v211, %v304
    %v306 = vpop.f32.mrf.mxu0
    %307 = vmatprep.mubr.f32.mxu0 0.0
    %308 = vmatmul.mubr.f32.gmra.mxu0 %v188
    %v309 = vpop.f32.mrf.mxu0
    %v310 = vadd.f32 %v211, %v309
    %v311 = vpop.f32.mrf.mxu0
    %312 = vmatprep.mubr.f32.mxu0 0.0
    %313 = vmatmul.mubr.f32.gmra.mxu0 %v189
    %v314 = vpop.f32.mrf.mxu0
    %v315 = vadd.f32 %v211, %v314
    %v316 = vpop.f32.mrf.mxu0
    %317 = vdwg.mxu0
    %318 = vst [vmem:[#allocation5] sm:$0xff] %v280
    %319 = vst [vmem:[#allocation5 + $0x8] sm:$0xff] %v285
    %320 = vst [vmem:[#allocation5 + $0x10] sm:$0xff] %v290
    %321 = vst [vmem:[#allocation5 + $0x18] sm:$0xff] %v295
    %322 = vst [vmem:[#allocation5 + $0x20] sm:$0xff] %v300
    %323 = vst [vmem:[#allocation5 + $0x28] sm:$0xff] %v305
    %324 = vst [vmem:[#allocation5 + $0x30] sm:$0xff] %v310
    %325 = vst [vmem:[#allocation5 + $0x38] sm:$0xff] %v315
    // Predicated region
    $region26: #{tpu_custom_call.1} parent=1 // pred_check
      _
    $region27: #{tpu_custom_call.1} parent=1 // pred_check_branch
      %327 = sbr.rel (0) target = $region29
    $region28: #{tpu_custom_call.1} parent=1 // pred_region
      %s329 = ssub.s32 1024, 1024
      %330 = vsyncadd [#allocation4], %s329
      %s331 = sshll.u32 [#allocation5], 4
      %s332 = int_to_ptr.vmem [resolvable:$true] %s331
      %337 = dma.vmem_to_hbm [thread:$0]  %s332, 1024, %s5, [#allocation4], 128, 128, 8
    $region29: #{tpu_custom_call.1} parent=1 // pred_fallthru
      _
    // Predicated region
    $region30: #{tpu_custom_call.1} parent=1 // pred_check
      _
    $region31: #{tpu_custom_call.1} parent=1 // pred_check_branch
      %339 = sbr.rel (0) target = $region33
    $region32: #{tpu_custom_call.1} parent=1 // pred_region
      %340 = dma.done [#allocation4], 1024
    $region33: #{tpu_custom_call.1} parent=1 // pred_fallthru
      _
    %341 = vsyncpa [#allocation3], 1
    %342 = vsyncpa [#allocation4], 1

</llo_original>
